<compile_context>
chip_gen: v7x
topology: tpu7x:2x2x1
jax: 0.10.0
libtpu: 0.0.40
codegen_flags: <defaults>
</compile_context>

<pallas_src>
import numpy as np
import jax
import jax.numpy as jnp
from jax.experimental import pallas as pl
from jax.experimental.pallas import tpu as pltpu

GRAVITY = 9.81
MASS = 0.15

_LANE = 128
_MAX_TILE = 2048  # lane-dense tile cap (knee of the overhead/bandwidth curve)


def _round_up(n: int, m: int) -> int:
    return ((n + m - 1) // m) * m


def _make_kernel(tile: int, dt: float):
    dt = float(dt)
    dvy = -GRAVITY * MASS * dt          # per-step change of vy
    cq = 0.5 * dvy * dt                 # quadratic coefficient for y

    def kernel(angle_ref, vel_ref, traj_ref):
        # --- scalars from SMEM (scalar path, no input DMA tiles) ----------
        ang = angle_ref[0]
        vel = vel_ref[0]

        # Broadcast once into tiny vregs; trig on the EUP/VPU.
        ang_v = jnp.full((1, 1), ang, dtype=jnp.float32)
        vel_v = jnp.full((1, 1), vel, dtype=jnp.float32)
        cx = vel_v * jnp.cos(ang_v) * jnp.float32(dt)   # (1,1)  vx*dt
        cy = vel_v * jnp.sin(ang_v) * jnp.float32(dt)   # (1,1)  vy0*dt

        # (2,1) coefficient columns: row0 -> x, row1 -> y.
        rows = jax.lax.broadcasted_iota(jnp.int32, (2, 1), 0)
        coef_lin = jnp.where(rows == 0, cx, cy)                          # (2,1)
        coef_quad = jnp.where(rows == 0, jnp.float32(0.0), jnp.float32(cq))

        # --- per-tile step indices (int32: exact k*(k+1) up to ~46k steps) -
        i = pl.program_id(0)
        base = i * tile
        ki = base + 1 + jax.lax.broadcasted_iota(jnp.int32, (1, tile), 1)  # (1,T)
        k_f = ki.astype(jnp.float32)
        kk1_f = (ki * (ki + 1)).astype(jnp.float32)

        # Single full-tile (2, T) store: 2 FMAs per lane, unmasked vst.
        traj_ref[...] = coef_lin * k_f + coef_quad * kk1_f

    return kernel


def throwing_sphere_forward(angle: jax.Array, velocity: jax.Array,
                            steps: int, dt: float):
    """Mirrors ThrowingSphereModel.forward(steps, dt) -> (x, y, trajectory)."""
    steps = int(steps)
    dt = float(dt)

    # Lane-dense tiling of the time axis (pad, compute, slice).
    if steps <= _MAX_TILE:
        tile = _round_up(steps, _LANE)
    else:
        tile = _MAX_TILE
    padded = _round_up(steps, tile)
    grid = (padded // tile,)

    angle_s = angle.reshape(1).astype(jnp.float32)
    vel_s = velocity.reshape(1).astype(jnp.float32)

    kernel = _make_kernel(tile, dt)
    traj_padded = pl.pallas_call(
        kernel,
        out_shape=jax.ShapeDtypeStruct((2, padded), jnp.float32),
        grid=grid,
        in_specs=[
            pl.BlockSpec(memory_space=pltpu.MemorySpace.SMEM),   # angle
            pl.BlockSpec(memory_space=pltpu.MemorySpace.SMEM),   # velocity
        ],
        out_specs=pl.BlockSpec((2, tile), lambda i: (0, i)),
        compiler_params=pltpu.CompilerParams(
            dimension_semantics=("parallel",)),
        cost_estimate=pl.CostEstimate(
            flops=6 * padded,
            transcendentals=2,
            bytes_accessed=2 * padded * 4 + 8),
    )(angle_s, vel_s)

    traj = traj_padded[:, :steps]
    last = traj_padded[:, steps - 1]
    x = last[0:1]          # final x, shape (1,) like the PyTorch parameter-shaped tensor
    y = last[1:2]          # final y, shape (1,)
    return x, y, traj


def _reference(angle, velocity, steps, dt):
    """Pure-numpy sequential reference (mirrors the PyTorch loop)."""
    a = float(angle[0]); v = float(velocity[0])
    vx = v * np.cos(a); vy = v * np.sin(a)
    x = 0.0; y = 0.0
    traj = np.zeros((2, steps), dtype=np.float64)
    for s in range(steps):
        vy += -GRAVITY * MASS * dt
        x += vx * dt
        y += vy * dt
        traj[0, s] = x
        traj[1, s] = y
    return np.float64(x), np.float64(y), traj


if __name__ == "__main__":
    key = jax.random.PRNGKey(0)  # deterministic seed (module has no tensor inputs)

    # Parameters exactly as in ThrowingSphereModel.__init__
    angle = jnp.ones((1,), dtype=jnp.float32)
    velocity = 10.0 * jnp.ones((1,), dtype=jnp.float32)

    # --- primary check: small steps (matches the original toy usage) -------
    steps, dt = 8, 0.1
    x, y, traj = throwing_sphere_forward(angle, velocity, steps, dt)
    jax.block_until_ready((x, y, traj))

    x_ref, y_ref, traj_ref = _reference(np.asarray(angle), np.asarray(velocity), steps, dt)
    assert x.shape == (1,) and y.shape == (1,) and traj.shape == (2, steps)
    np.testing.assert_allclose(np.asarray(x)[0], x_ref, rtol=1e-5, atol=1e-5)
    np.testing.assert_allclose(np.asarray(y)[0], y_ref, rtol=1e-5, atol=1e-5)
    np.testing.assert_allclose(np.asarray(traj), traj_ref, rtol=1e-5, atol=1e-5)

    # --- secondary check: large steps exercises the multi-tile grid path ---
    steps2, dt2 = 5000, 0.1
    x2, y2, traj2 = throwing_sphere_forward(angle, velocity, steps2, dt2)
    jax.block_until_ready((x2, y2, traj2))
    x2_ref, y2_ref, traj2_ref = _reference(np.asarray(angle), np.asarray(velocity), steps2, dt2)
    assert traj2.shape == (2, steps2)
    np.testing.assert_allclose(np.asarray(traj2), traj2_ref, rtol=1e-4, atol=5e-2)
    np.testing.assert_allclose(np.asarray(x2)[0], x2_ref, rtol=1e-4, atol=5e-2)
    np.testing.assert_allclose(np.asarray(y2)[0], y2_ref, rtol=1e-4, atol=5e-2)

    print("KERNEL_OK")
</pallas_src>

<mosaic_0001>
module attributes {stable_mosaic.version = 11 : i64} {
  func.func @kernel(%arg0: i32, %arg1: memref<1xf32, #tpu.memory_space<smem>>, %arg2: memref<1xf32, #tpu.memory_space<smem>>, %arg3: memref<2x128xf32, #tpu.memory_space<vmem>>) attributes {dimension_semantics = [#tpu.dimension_semantics<parallel>], iteration_bounds = array<i64: 1>, scalar_prefetch = 0 : i64, scratch_operands = 0 : i64, tpu.core_type = #tpu.core_type<tc>, window_params = [{transform_indices = @transform_0, window_bounds = array<i64: 1>}, {transform_indices = @transform_1, window_bounds = array<i64: 1>}, {transform_indices = @transform_2, window_bounds = array<i64: 2, 128>}]} {
    %c0 = arith.constant 0 : index
    %0 = memref.load %arg1[%c0] : memref<1xf32, #tpu.memory_space<smem>>
    %c0_0 = arith.constant 0 : index
    %1 = memref.load %arg2[%c0_0] : memref<1xf32, #tpu.memory_space<smem>>
    %2 = vector.broadcast %0 : f32 to vector<1x1xf32>
    %3 = vector.broadcast %1 : f32 to vector<1x1xf32>
    %4 = math.cos %2 : vector<1x1xf32>
    %5 = arith.mulf %3, %4 : vector<1x1xf32>
    %cst = arith.constant 1.000000e-01 : f32
    %6 = vector.broadcast %cst : f32 to vector<1x1xf32>
    %7 = arith.mulf %5, %6 : vector<1x1xf32>
    %8 = math.sin %2 : vector<1x1xf32>
    %9 = arith.mulf %3, %8 : vector<1x1xf32>
    %cst_1 = arith.constant 1.000000e-01 : f32
    %10 = vector.broadcast %cst_1 : f32 to vector<1x1xf32>
    %11 = arith.mulf %9, %10 : vector<1x1xf32>
    %12 = tpu.iota {dimensions = array<i32: 0>} : vector<2x1xi32>
    %c0_i32 = arith.constant 0 : i32
    %13 = vector.broadcast %c0_i32 : i32 to vector<2x1xi32>
    %14 = arith.cmpi eq, %12, %13 : vector<2x1xi32>
    %15 = vector.shape_cast %7 : vector<1x1xf32> to vector<1x1xf32>
    %16 = vector.broadcast %15 : vector<1x1xf32> to vector<2x1xf32>
    %17 = vector.shape_cast %11 : vector<1x1xf32> to vector<1x1xf32>
    %18 = vector.broadcast %17 : vector<1x1xf32> to vector<2x1xf32>
    %19 = arith.select %14, %16, %18 : vector<2x1xi1>, vector<2x1xf32>
    %c0_i32_2 = arith.constant 0 : i32
    %20 = vector.broadcast %c0_i32_2 : i32 to vector<2x1xi32>
    %21 = arith.cmpi eq, %12, %20 : vector<2x1xi32>
    %cst_3 = arith.constant 0.000000e+00 : f32
    %cst_4 = arith.constant -7.357500e-03 : f32
    %22 = vector.broadcast %cst_3 : f32 to vector<2x1xf32>
    %23 = vector.broadcast %cst_4 : f32 to vector<2x1xf32>
    %24 = arith.select %21, %22, %23 : vector<2x1xi1>, vector<2x1xf32>
    %c128_i32 = arith.constant 128 : i32
    %25 = arith.muli %arg0, %c128_i32 : i32
    %c1_i32 = arith.constant 1 : i32
    %26 = arith.addi %25, %c1_i32 : i32
    %27 = tpu.iota {dimensions = array<i32: 1>} : vector<1x128xi32>
    %28 = vector.broadcast %26 : i32 to vector<1x128xi32>
    %29 = arith.addi %28, %27 : vector<1x128xi32>
    %30 = arith.sitofp %29 : vector<1x128xi32> to vector<1x128xf32>
    %c1_i32_5 = arith.constant 1 : i32
    %31 = vector.broadcast %c1_i32_5 : i32 to vector<1x128xi32>
    %32 = arith.addi %29, %31 : vector<1x128xi32>
    %33 = arith.muli %29, %32 : vector<1x128xi32>
    %34 = arith.sitofp %33 : vector<1x128xi32> to vector<1x128xf32>
    %35 = vector.broadcast %19 : vector<2x1xf32> to vector<2x128xf32>
    %36 = vector.broadcast %30 : vector<1x128xf32> to vector<2x128xf32>
    %37 = arith.mulf %35, %36 : vector<2x128xf32>
    %38 = vector.broadcast %24 : vector<2x1xf32> to vector<2x128xf32>
    %39 = vector.broadcast %34 : vector<1x128xf32> to vector<2x128xf32>
    %40 = arith.mulf %38, %39 : vector<2x128xf32>
    %41 = arith.addf %37, %40 : vector<2x128xf32>
    %c0_6 = arith.constant 0 : index
    %c0_7 = arith.constant 0 : index
    %42 = vector.load %arg3[%c0_6, %c0_7] : memref<2x128xf32, #tpu.memory_space<vmem>>, vector<2x128xf32>
    tpu.vector_store %arg3[%c0_6, %c0_7], %41 {strides = array<i32>} : memref<2x128xf32, #tpu.memory_space<vmem>>, vector<2x128xf32>,
    return
  }
  func.func @transform_0(%arg0: i32) -> i32 {
    %c0_i32 = arith.constant 0 : i32
    %c0_i32_0 = arith.constant 0 : i32
    return %c0_i32 : i32
  }
  func.func @transform_1(%arg0: i32) -> i32 {
    %c0_i32 = arith.constant 0 : i32
    %c0_i32_0 = arith.constant 0 : i32
    return %c0_i32 : i32
  }
  func.func @transform_2(%arg0: i32) -> (i32, i32) {
    %c0_i32 = arith.constant 0 : i32
    %c0_i32_0 = arith.constant 0 : i32
    return %c0_i32, %arg0 : i32, i32
  }
}

</mosaic_0001>

<llo_original>
// kernel: tpu_custom_call.1
$region0: #{tpu_custom_call.1}
  #allocation0 [shape = 'u32[]', space=smem, size = 0x4, offset = 0x4, fixed_abs, tag = 'smem constant byte address 0x4 - core index']
  #allocation1 [shape = 'u32[144,128]{1,0:T(1,128)}', space=vmem, size = 0x12000, scoped, tag = 'internal scratch']
  #allocation2 [shape = 'f32[1]{0:T(128)S(6)}', space=smem, size = 0x200, scoped, tag = 'scoped memory for tpu_custom_call.1']
  #allocation3 [shape = 'f32[1]{0:T(128)S(6)}', space=smem, size = 0x200, scoped, tag = 'scoped memory for tpu_custom_call.1']
  %s0 = inlined_call_operand.<no memory space> [shape: f32[1], index: 0, kind: input, shape index: {}]
  %s1 = inlined_call_operand.<no memory space> [shape: f32[1], index: 1, kind: input, shape index: {}]
  %s2 = inlined_call_operand.hbm [shape: f32[2,128], index: 2, kind: output, shape index: {}]
  %s3 = sld [smem:[#allocation0]]
  $region18: #{tpu_custom_call.1} parent=0
    _
  %s5 = ssub.s32 1, %s3
  %s6 = scalar_select 0, %s5, %s3
  %7 = sst [smem:[#allocation2]] %s0
  %8 = sst [smem:[#allocation3]] %s1
  $region1: #{tpu_custom_call.1} parent=0
    #allocation4 [shape = 'u8[1024]{0}', space=vmem, size = 0x400, scoped, tag = 'output window, operand 0, single buffered']
    #allocation5 [shape = 's32[1]{0}', space=sflag, size = 0x4, scoped, tag = 'scoped memory for tpu_custom_call.1']
    %9 = vsyncpa [#allocation5], 0
    // Predicated region
    $region2: #{tpu_custom_call.1} parent=1 // pred_check
      _
    $region3: #{tpu_custom_call.1} parent=1 // pred_check_branch
      %11 = sbr.rel (0) target = $region5
    $region4: #{tpu_custom_call.1} parent=1 // pred_region
      _
    $region5: #{tpu_custom_call.1} parent=1 // pred_fallthru
      _
    // Predicated region
    $region6: #{tpu_custom_call.1} parent=1 // pred_check
      _
    $region7: #{tpu_custom_call.1} parent=1 // pred_check_branch
      %13 = sbr.rel (0) target = $region9
    $region8: #{tpu_custom_call.1} parent=1 // pred_region
      _
    $region9: #{tpu_custom_call.1} parent=1 // pred_fallthru
      _
    %s14 = sld [smem:[#allocation2]]
    %s15 = sld [smem:[#allocation3]]
    %v16 = vstv %s14
    %v17 = vstv %s15
    %v18 = vand.u32 2147483647, %v16
    %vm19 = vcmp.le.f32.partialorder %v18, 0.7853982
    %vm20 = vcmp.lt.s32.totalorder %v16, 0
    %v21 = vand.u32 %v16, 2139095040
    %v22 = vshrl.u32 %v21, 23
    %v23 = vsub.s32 %v22, 127
    %v24 = vand.u32 2147483647, %v16
    %v25 = vand.u32 %v24, 8388607
    %v26 = vor.u32 %v25, 8388608
    %v27 = vsub.s32 0, %v26
    %v28 = vadd.s32 %v23, 1
    %vm29 = vcmp.gt.s32.totalorder %v28, 0
    %v30 = vsel %vm29, %v28, 0
    %v31 = vshrl.u32 %v30, 5
    %v32 = vand.u32 %v30, 31
    %v33 = vsub.s32 32, %v32
    %v34 = vshrl.u32 683565275, %v33
    %v35 = vshll.u32 683565275, %v32
    %v36 = vshrl.u32 2475754826, %v33
    %v37 = vor.u32 %v35, %v36
    %v38 = vshll.u32 2475754826, %v32
    %v39 = vshrl.u32 2131351028, %v33
    %v40 = vor.u32 %v38, %v39
    %v41 = vshll.u32 2131351028, %v32
    %v42 = vshrl.u32 2102212464, %v33
    %v43 = vor.u32 %v41, %v42
    %v44 = vshll.u32 2102212464, %v32
    %v45 = vshrl.u32 920167782, %v33
    %v46 = vor.u32 %v44, %v45
    %v47 = vshll.u32 920167782, %v32
    %v48 = vshrl.u32 1326507024, %v33
    %v49 = vor.u32 %v47, %v48
    %vm50 = vcmp.lt.s32.totalorder %v31, 1
    %vm51 = vcmp.lt.s32.totalorder %v31, 2
    %vm52 = vcmp.lt.s32.totalorder %v31, 3
    %vm53 = vcmp.lt.s32.totalorder %v31, 4
    %v54 = vsel %vm50, %v34, %v37
    %v55 = vsel %vm53, %v43, 2102212464
    %v56 = vsel %vm52, %v40, %v55
    %v57 = vsel %vm51, %v54, %v56
    %v58 = vsel %vm50, %v37, %v40
    %v59 = vsel %vm53, %v46, 920167782
    %v60 = vsel %vm52, %v43, %v59
    %v61 = vsel %vm51, %v58, %v60
    %v62 = vsel %vm50, %v40, %v43
    %v63 = vsel %vm53, %v49, 1326507024
    %v64 = vsel %vm52, %v46, %v63
    %v65 = vsel %vm51, %v62, %v64
    %v66 = vshll.u32 %v26, 8
    %v67 = vmul.u32.u64.compose %v66, %v65
    %v68 = vextract.low.u32 %v67
    %v69 = vextract.high.u32 %v67
    %v70 = vmul.u32.u64.compose %v66, %v61
    %v71 = vextract.low.u32 %v70
    %v72 = vextract.high.u32 %v70
    %v73 = vmul.u32 %v66, %v57
    %v74 = vadd.s32 %v69, %v71
    %vm75 = vc.u32 %v69, %v71
    %v76 = vadd.s32 %v72, 1
    %v77 = vsel %vm75, %v76, %v72
    %v78 = vadd.s32 %v73, %v77
    %v79 = vadd.s32 %v78, 536870912
    %v80 = vshrl.u32 %v79, 30
    %v81 = vshll.u32 %v80, 30
    %v82 = vsub.s32 %v78, %v81
    %vm83 = vcmp.lt.s32.totalorder %v82, 0
    %v84 = vsub.s32 0, %v82
    %v85 = vsel %vm83, %v84, %v82
    %v86 = vclz %v85
    %v87 = vsub.s32 %v86, 2
    %vm88 = vcmp.gt.s32.totalorder 0, %v87
    %v89 = vsel %vm88, 0, %v87
    %v90 = vsub.s32 32, %v89
    %v91 = vshll.u32 %v82, %v89
    %v92 = vshrl.u32 %v74, %v90
    %v93 = vor.u32 %v91, %v92
    %v94 = vsub.s32 4294967266, %v89
    %v95 = vadd.s32 %v94, 127
    %v96 = vshll.u32 %v95, 23
    %v97 = vor.u32 4788187, %v96
    %v98 = vand.u32 2147483647, %v97
    %v100 = vcvt.s32.f32 %v93
    %v101 = vmul.f32 %v100, %v98
    %v102 = vxor.u32 %v101, 2147483648
    %v103 = vsel %vm20, %v102, %v101
    %v104 = vsub.s32 4, %v80
    %v105 = vsel %vm20, %v104, %v80
    %v106 = vsel %vm19, %v16, %v103
    %v107 = vsel %vm19, 0, %v105
    %v108 = vcosq.f32.pop %v106
    %v109 = vsinq.f32.pop %v106
    %vm110 = vweird.f32 %v16
    %v111 = vand.u32 %v107, 3
    %vm112 = vcmp.lt.s32.totalorder %v111, 2
    %vm113 = vcmp.eq.s32.totalorder %v111, 0
    %v114 = vxor.u32 %v109, 2147483648
    %v115 = vsel %vm113, %v108, %v114
    %vm116 = vcmp.eq.s32.totalorder %v111, 2
    %v117 = vxor.u32 %v108, 2147483648
    %v118 = vsel %vm116, %v117, %v109
    %v119 = vsel %vm112, %v115, %v118
    %v120 = vsel %vm110, nan, %v119
    %v121 = vmul.f32 %v17, %v120
    %v122 = vmul.f32 %v121, 0.1
    %v123 = vand.u32 2147483647, %v16
    %vm124 = vcmp.le.f32.partialorder %v123, 0.7853982
    %vm125 = vcmp.lt.s32.totalorder %v16, 0
    %v126 = vand.u32 %v16, 2139095040
    %v127 = vshrl.u32 %v126, 23
    %v128 = vsub.s32 %v127, 127
    %v129 = vand.u32 2147483647, %v16
    %v130 = vand.u32 %v129, 8388607
    %v131 = vor.u32 %v130, 8388608
    %v132 = vsub.s32 0, %v131
    %v133 = vadd.s32 %v128, 1
    %vm134 = vcmp.gt.s32.totalorder %v133, 0
    %v135 = vsel %vm134, %v133, 0
    %v136 = vshrl.u32 %v135, 5
    %v137 = vand.u32 %v135, 31
    %v138 = vsub.s32 32, %v137
    %v139 = vshrl.u32 683565275, %v138
    %v140 = vshll.u32 683565275, %v137
    %v141 = vshrl.u32 2475754826, %v138
    %v142 = vor.u32 %v140, %v141
    %v143 = vshll.u32 2475754826, %v137
    %v144 = vshrl.u32 2131351028, %v138
    %v145 = vor.u32 %v143, %v144
    %v146 = vshll.u32 2131351028, %v137
    %v147 = vshrl.u32 2102212464, %v138
    %v148 = vor.u32 %v146, %v147
    %v149 = vshll.u32 2102212464, %v137
    %v150 = vshrl.u32 920167782, %v138
    %v151 = vor.u32 %v149, %v150
    %v152 = vshll.u32 920167782, %v137
    %v153 = vshrl.u32 1326507024, %v138
    %v154 = vor.u32 %v152, %v153
    %vm155 = vcmp.lt.s32.totalorder %v136, 1
    %vm156 = vcmp.lt.s32.totalorder %v136, 2
    %vm157 = vcmp.lt.s32.totalorder %v136, 3
    %vm158 = vcmp.lt.s32.totalorder %v136, 4
    %v159 = vsel %vm155, %v139, %v142
    %v160 = vsel %vm158, %v148, 2102212464
    %v161 = vsel %vm157, %v145, %v160
    %v162 = vsel %vm156, %v159, %v161
    %v163 = vsel %vm155, %v142, %v145
    %v164 = vsel %vm158, %v151, 920167782
    %v165 = vsel %vm157, %v148, %v164
    %v166 = vsel %vm156, %v163, %v165
    %v167 = vsel %vm155, %v145, %v148
    %v168 = vsel %vm158, %v154, 1326507024
    %v169 = vsel %vm157, %v151, %v168
    %v170 = vsel %vm156, %v167, %v169
    %v171 = vshll.u32 %v131, 8
    %v172 = vmul.u32.u64.compose %v171, %v170
    %v173 = vextract.low.u32 %v172
    %v174 = vextract.high.u32 %v172
    %v175 = vmul.u32.u64.compose %v171, %v166
    %v176 = vextract.low.u32 %v175
    %v177 = vextract.high.u32 %v175
    %v178 = vmul.u32 %v171, %v162
    %v179 = vadd.s32 %v174, %v176
    %vm180 = vc.u32 %v174, %v176
    %v181 = vadd.s32 %v177, 1
    %v182 = vsel %vm180, %v181, %v177
    %v183 = vadd.s32 %v178, %v182
    %v184 = vadd.s32 %v183, 536870912
    %v185 = vshrl.u32 %v184, 30
    %v186 = vshll.u32 %v185, 30
    %v187 = vsub.s32 %v183, %v186
    %vm188 = vcmp.lt.s32.totalorder %v187, 0
    %v189 = vsub.s32 0, %v187
    %v190 = vsel %vm188, %v189, %v187
    %v191 = vclz %v190
    %v192 = vsub.s32 %v191, 2
    %vm193 = vcmp.gt.s32.totalorder 0, %v192
    %v194 = vsel %vm193, 0, %v192
    %v195 = vsub.s32 32, %v194
    %v196 = vshll.u32 %v187, %v194
    %v197 = vshrl.u32 %v179, %v195
    %v198 = vor.u32 %v196, %v197
    %v199 = vsub.s32 4294967266, %v194
    %v200 = vadd.s32 %v199, 127
    %v201 = vshll.u32 %v200, 23
    %v202 = vor.u32 4788187, %v201
    %v203 = vand.u32 2147483647, %v202
    %v205 = vcvt.s32.f32 %v198
    %v206 = vmul.f32 %v205, %v203
    %v207 = vxor.u32 %v206, 2147483648
    %v208 = vsel %vm125, %v207, %v206
    %v209 = vsub.s32 4, %v185
    %v210 = vsel %vm125, %v209, %v185
    %v211 = vsel %vm124, %v16, %v208
    %v212 = vsel %vm124, 0, %v210
    %v213 = vcosq.f32.pop %v211
    %v214 = vsinq.f32.pop %v211
    %vm215 = vweird.f32 %v16
    %v216 = vadd.s32 %v212, 3
    %v217 = vand.u32 %v216, 3
    %vm218 = vcmp.lt.s32.totalorder %v217, 2
    %vm219 = vcmp.eq.s32.totalorder %v217, 0
    %v220 = vxor.u32 %v214, 2147483648
    %v221 = vsel %vm219, %v213, %v220
    %vm222 = vcmp.eq.s32.totalorder %v217, 2
    %v223 = vxor.u32 %v213, 2147483648
    %v224 = vsel %vm222, %v223, %v214
    %v225 = vsel %vm218, %v221, %v224
    %v226 = vsel %vm215, nan, %v225
    %v227 = vmul.f32 %v17, %v226
    %v228 = vmul.f32 %v227, 0.1
    %v229 = vlaneseq
    %v230 = vshrl.u32 %v229, 7
    %vm231 = vcmp.eq.s32.totalorder %v230, 0
    %v232 = vsel %vm231, %v122, %v228
    %v233 = vsel %vm231, 0.0, -0.0073575
    %s234 = smul.u32 0, 128
    %s235 = sadd.s32 %s234, 1
    %v236 = vlaneseq
    %v237 = vand.u32 %v236, 127
    %v238 = vstv %s235
    %v239 = vadd.s32 %v238, %v237
    %v240 = vcvt.s32.f32 %v239
    %v241 = vadd.s32 %v239, 1
    %v242 = vmul.u32 %v239, %v241
    %v243 = vcvt.s32.f32 %v242
    %v244 = vmul.f32 %v232, %v240
    %v245 = vmul.f32 %v233, %v243
    %v246 = vadd.f32 %v244, %v245
    %247 = vst [vmem:[#allocation4] sm:$0x3] %v246
    // Predicated region
    $region10: #{tpu_custom_call.1} parent=1 // pred_check
      _
    $region11: #{tpu_custom_call.1} parent=1 // pred_check_branch
      %249 = sbr.rel (0) target = $region13
    $region12: #{tpu_custom_call.1} parent=1 // pred_region
      %s251 = ssub.s32 32, 32
      %252 = vsyncadd [#allocation5], %s251
      %s254 = sshll.u32 [#allocation4], 4
      %s255 = int_to_ptr.vmem [resolvable:$true] %s254
      %257 = dma.vmem_to_hbm [thread:$0]  %s255, 32, %s2, [#allocation5]
    $region13: #{tpu_custom_call.1} parent=1 // pred_fallthru
      _
    // Predicated region
    $region14: #{tpu_custom_call.1} parent=1 // pred_check
      _
    $region15: #{tpu_custom_call.1} parent=1 // pred_check_branch
      %259 = sbr.rel (0) target = $region17
    $region16: #{tpu_custom_call.1} parent=1 // pred_region
      %260 = dma.done [#allocation5], 32
    $region17: #{tpu_custom_call.1} parent=1 // pred_fallthru
      _
    %261 = vsyncpa [#allocation5], 1

</llo_original>
